<compile_context>
chip_gen: v6e
topology: v6e:2x2x1
jax: 0.10.0
libtpu: 0.0.40
codegen_flags: <defaults>
</compile_context>

<pallas_src>
import functools

import jax
import jax.numpy as jnp
from jax import lax
from jax.experimental import pallas as pl
from jax.experimental.pallas import tpu as pltpu


def _fold_tile(x_sum, x_max, sum_ref, max_ref):
    """Fold a (Bt, C, T) tile into (Bt, C, 128) lane-wide accumulators.

    Static 128-lane chunk slices -> pure per-lane VALU adds/maxes; no XLU work
    on the streaming path.  T is always a multiple of 128.
    """
    t = x_sum.shape[-1]
    s = x_sum[:, :, 0:128]
    m = x_max[:, :, 0:128]
    for k in range(1, t // 128):
        s = s + x_sum[:, :, k * 128:(k + 1) * 128]
        m = jnp.maximum(m, x_max[:, :, k * 128:(k + 1) * 128])
    sum_ref[...] += s
    max_ref[...] = jnp.maximum(max_ref[...], m)


def _channel_attn_kernel(x_ref, w1_ref, w2_ref, o_ref, sum_ref, max_ref,
                         *, hw, tile_hw):
    # x_ref block: (Bt, C, T)   -- T spatial positions on the lane axis
    # w1_ref:      (Ch, C)      -- fc1 weight (Conv2d 1x1, no bias)
    # w2_ref:      (C, Ch)      -- fc2 weight (Conv2d 1x1, no bias)
    # o_ref block: (Bt, C, 1)
    # sum_ref/max_ref: (Bt, C, 128) f32 lane-wide accumulators (persist over HW steps)
    t = pl.program_id(1)
    num_t = pl.num_programs(1)

    @pl.when(t == 0)
    def _init():
        sum_ref[...] = jnp.zeros_like(sum_ref)
        max_ref[...] = jnp.full_like(max_ref, -jnp.inf)

    x = x_ref[...].astype(jnp.float32)                     # (Bt, C, T)

    if hw % tile_hw != 0:
        # Only the trailing tile is partial: gate the mask so full tiles run
        # the cheap streaming path (keeps v7x DMA-bound, no per-step iota).
        @pl.when(t < num_t - 1)
        def _full_tile():
            _fold_tile(x, x, sum_ref, max_ref)

        @pl.when(t == num_t - 1)
        def _partial_tile():
            base = t * tile_hw
            idx = lax.broadcasted_iota(jnp.int32, x.shape, dimension=2)
            valid = (base + idx) < hw
            x_sum = jnp.where(valid, x, 0.0)
            x_max = jnp.where(valid, x, -jnp.inf)
            _fold_tile(x_sum, x_max, sum_ref, max_ref)
    else:
        _fold_tile(x, x, sum_ref, max_ref)

    @pl.when(t == num_t - 1)
    def _finalize():
        w1 = w1_ref[...].astype(jnp.float32)               # (Ch, C)
        w2 = w2_ref[...].astype(jnp.float32)               # (C, Ch)
        inv_hw = 1.0 / hw
        bt = o_ref.shape[0]
        # Static unroll over the batch block; runs once per streaming pass,
        # off the DMA-bound path.  [avg | max] fused into one (C, 2) operand
        # so the MLP is two small matmuls per batch row.
        for b in range(bt):
            avg = jnp.sum(sum_ref[b], axis=-1, keepdims=True) * inv_hw   # (C, 1)
            mx = jnp.max(max_ref[b], axis=-1, keepdims=True)             # (C, 1)
            pooled = jnp.concatenate([avg, mx], axis=1)                  # (C, 2)
            h = jnp.maximum(
                jnp.dot(w1, pooled, preferred_element_type=jnp.float32), 0.0)  # (Ch, 2)
            y = jnp.dot(w2, h, preferred_element_type=jnp.float32)      # (C, 2)
            out = jax.nn.sigmoid(y[:, 0:1] + y[:, 1:2])                  # (C, 1)
            o_ref[b] = out.astype(o_ref.dtype)


def _vmem_capacity_bytes():
    try:
        return int(pltpu.get_tpu_info().vmem_capacity_bytes)
    except Exception:  # conservative fallback (v5e/v6e physical VMEM)
        return 128 * 1024 * 1024


def _pick_blocking(b, c, hw, dtype, tile_hw=None, block_b=None):
    """Choose (batch block, HW tile) so each grid step moves ~max_tile_bytes."""
    itemsize = jnp.dtype(dtype).itemsize
    vmem_cap = _vmem_capacity_bytes()
    # ~8 MiB per x buffer keeps the ~0.35 us/step overhead small even at v7x
    # HBM bandwidth, but never more than 1/8 of physical VMEM (v7x = 64 MiB).
    max_tile_bytes = min(8 * 1024 * 1024, vmem_cap // 8)
    hw_padded = pl.cdiv(hw, 128) * 128

    if tile_hw is None:
        tile_hw = max_tile_bytes // max(1, c * itemsize)
        tile_hw = max(128, (tile_hw // 128) * 128)
        tile_hw = min(tile_hw, hw_padded)
    else:
        tile_hw = min(max(128, (int(tile_hw) // 128) * 128), hw_padded)

    if block_b is None:
        # When one row fits well under budget, amortize step overhead over
        # several batch rows.
        row_bytes = c * tile_hw * itemsize
        block_b = max(1, min(b, max_tile_bytes // max(1, row_bytes)))
    block_b = max(1, min(int(block_b), b))
    while b % block_b != 0:          # keep batch blocks exact (no ragged batch)
        block_b -= 1
    return block_b, tile_hw, vmem_cap


def channel_attention(x_nchw, w1, w2, *, tile_hw=None, block_b=None):
    """x_nchw: (B, C, H, W); w1: (C//16, C) fc1 weight; w2: (C, C//16) fc2 weight.
    Returns sigmoid(fc2(relu(fc1(avgpool))) + fc2(relu(fc1(maxpool)))) as (B, C, 1, 1)."""
    B, C, H, W = x_nchw.shape
    Ch = w1.shape[0]
    HW = H * W

    # Free view: H, W are contiguous so this is just a reshape, no HBM copy.
    x = x_nchw.reshape(B, C, HW)

    bt, tile_hw, vmem_cap = _pick_blocking(B, C, HW, x.dtype, tile_hw, block_b)
    num_t = pl.cdiv(HW, tile_hw)

    kernel = functools.partial(_channel_attn_kernel, hw=HW, tile_hw=tile_hw)

    # Explicit scoped-VMEM budget: 2x double-buffered x tile + weights +
    # accumulators + output + slack, capped at half of physical VMEM
    # (generation-aware: respects v7x's 64 MiB, lifts v5e's 16 MiB default).
    itemsize = jnp.dtype(x.dtype).itemsize
    x_block_bytes = bt * C * tile_hw * itemsize
    w_bytes = 2 * Ch * C * jnp.dtype(w1.dtype).itemsize
    acc_bytes = 2 * bt * C * 128 * 4
    out_bytes = bt * C * itemsize
    vmem_limit = (2 * x_block_bytes + 2 * w_bytes + acc_bytes + 2 * out_bytes
                  + (2 << 20))
    vmem_limit = int(min(max(vmem_limit, 16 << 20), vmem_cap // 2))

    out = pl.pallas_call(
        kernel,
        out_shape=jax.ShapeDtypeStruct((B, C, 1), x.dtype),
        grid_spec=pltpu.PrefetchScalarGridSpec(
            num_scalar_prefetch=0,
            grid=(B // bt, num_t),
            in_specs=[
                pl.BlockSpec((bt, C, tile_hw), lambda b, t: (b, 0, t)),
                pl.BlockSpec((Ch, C), lambda b, t: (0, 0)),
                pl.BlockSpec((C, Ch), lambda b, t: (0, 0)),
            ],
            # Output block is constant along the HW (reduction) axis -> stays
            # resident in VMEM; written only on the final HW step.
            out_specs=pl.BlockSpec((bt, C, 1), lambda b, t: (b, 0, 0)),
            scratch_shapes=[
                pltpu.VMEM((bt, C, 128), jnp.float32),   # lane-wide running sum
                pltpu.VMEM((bt, C, 128), jnp.float32),   # lane-wide running max
            ],
        ),
        compiler_params=pltpu.CompilerParams(
            dimension_semantics=("parallel", "arbitrary"),
            vmem_limit_bytes=vmem_limit),
    )(x, w1, w2)

    return out.reshape(B, C, 1, 1)


def channel_attention_ref(x_nchw, w1, w2):
    avg = jnp.mean(x_nchw, axis=(2, 3))                   # (B, C)
    mx = jnp.max(x_nchw, axis=(2, 3))                     # (B, C)

    def mlp(v):
        h = jnp.maximum(v @ w1.T, 0.0)                    # (B, Ch)
        return h @ w2.T                                   # (B, C)

    out = jax.nn.sigmoid(mlp(avg) + mlp(mx))
    return out.reshape(*out.shape, 1, 1)


def _check(name, x, w1, w2, **kw):
    out = jax.block_until_ready(channel_attention(x, w1, w2, **kw))
    ref = jax.block_until_ready(channel_attention_ref(x, w1, w2))
    assert out.shape == ref.shape, (name, out.shape, ref.shape)
    assert jnp.allclose(out, ref, atol=1e-5, rtol=1e-5), f"{name} mismatch vs reference"


if __name__ == "__main__":
    key = jax.random.PRNGKey(0)

    # --- Case 1: even tiling; tile_hw=128 / block_b=1 forces grid (2, 2) and
    # multi-step HW accumulation.  (Module uses in_planes // 16, so C >= 16.)
    B, C, H, W = 2, 64, 16, 16
    Ch = C // 16  # = 4
    kx, k1, k2, key = jax.random.split(key, 4)
    x = jax.random.normal(kx, (B, C, H, W), dtype=jnp.float32)
    w1 = jax.random.normal(k1, (Ch, C), dtype=jnp.float32) * 0.1
    w2 = jax.random.normal(k2, (C, Ch), dtype=jnp.float32) * 0.1
    _check("case1", x, w1, w2, tile_hw=128, block_b=1)

    # --- Case 2: ragged HW smaller than one tile (HW=63): masked path only,
    # default auto-blocking (batch blocking kicks in: Bt=2).
    B2, C2, H2, W2 = 2, 32, 7, 9
    Ch2 = C2 // 16  # = 2
    kx2, k12, k22, key = jax.random.split(key, 4)
    x2 = jax.random.normal(kx2, (B2, C2, H2, W2), dtype=jnp.float32)
    w12 = jax.random.normal(k12, (Ch2, C2), dtype=jnp.float32) * 0.1
    w22 = jax.random.normal(k22, (C2, Ch2), dtype=jnp.float32) * 0.1
    _check("case2", x2, w12, w22)

    # --- Case 3: ragged HW spanning multiple tiles (HW=135, tile=128):
    # exercises the gated mask (full tiles on the plain path, last tile masked).
    B3, C3, H3, W3 = 2, 32, 9, 15
    Ch3 = C3 // 16
    kx3, k13, k23, key = jax.random.split(key, 4)
    x3 = jax.random.normal(kx3, (B3, C3, H3, W3), dtype=jnp.float32)
    w13 = jax.random.normal(k13, (Ch3, C3), dtype=jnp.float32) * 0.1
    w23 = jax.random.normal(k23, (C3, Ch3), dtype=jnp.float32) * 0.1
    _check("case3", x3, w13, w23, tile_hw=128)

    # --- Case 4: small-HW, larger-B shape with fully automatic blocking
    # (batch blocking Bt > 1, single grid step).
    B4, C4, H4, W4 = 4, 32, 8, 8
    Ch4 = C4 // 16
    kx4, k14, k24 = jax.random.split(key, 3)
    x4 = jax.random.normal(kx4, (B4, C4, H4, W4), dtype=jnp.float32)
    w14 = jax.random.normal(k14, (Ch4, C4), dtype=jnp.float32) * 0.1
    w24 = jax.random.normal(k24, (C4, Ch4), dtype=jnp.float32) * 0.1
    _check("case4", x4, w14, w24)

    print("KERNEL_OK")
</pallas_src>

<mosaic_0001>
module attributes {stable_mosaic.version = 11 : i64} {
  func.func @_channel_attn_kernel(%arg0: i32, %arg1: i32, %arg2: memref<1x64x128xf32, #tpu.memory_space<vmem>>, %arg3: memref<4x64xf32, #tpu.memory_space<vmem>>, %arg4: memref<64x4xf32, #tpu.memory_space<vmem>>, %arg5: memref<1x64x1xf32, #tpu.memory_space<vmem>>, %arg6: memref<1x64x128xf32, #tpu.memory_space<vmem>>, %arg7: memref<1x64x128xf32, #tpu.memory_space<vmem>>) attributes {dimension_semantics = [#tpu.dimension_semantics<parallel>, #tpu.dimension_semantics<arbitrary>], iteration_bounds = array<i64: 2, 2>, scalar_prefetch = 0 : i64, scratch_operands = 2 : i64, tpu.core_type = #tpu.core_type<tc>, window_params = [{transform_indices = @transform_0, window_bounds = array<i64: 1, 64, 128>}, {pipeline_mode = #tpu.pipeline_mode<synchronous>, transform_indices = @transform_1, window_bounds = array<i64: 4, 64>}, {pipeline_mode = #tpu.pipeline_mode<synchronous>, transform_indices = @transform_2, window_bounds = array<i64: 64, 4>}, {transform_indices = @transform_3, window_bounds = array<i64: 1, 64, 1>}]} {
    %c0_i32 = arith.constant 0 : i32
    %0 = arith.cmpi eq, %arg1, %c0_i32 : i32
    %1 = arith.extui %0 : i1 to i32
    %c0_i32_0 = arith.constant 0 : i32
    %2 = arith.cmpi ne, %1, %c0_i32_0 : i32
    scf.if %2 {
      %cst = arith.constant 0.000000e+00 : f32
      %13 = vector.broadcast %cst : f32 to vector<1x64x128xf32>
      %c0_16 = arith.constant 0 : index
      %c0_17 = arith.constant 0 : index
      %c0_18 = arith.constant 0 : index
      %14 = vector.load %arg6[%c0_16, %c0_17, %c0_18] : memref<1x64x128xf32, #tpu.memory_space<vmem>>, vector<1x64x128xf32>
      tpu.vector_store %arg6[%c0_16, %c0_17, %c0_18], %13 {strides = array<i32>} : memref<1x64x128xf32, #tpu.memory_space<vmem>>, vector<1x64x128xf32>,
      %cst_19 = arith.constant 0xFF800000 : f32
      %15 = vector.broadcast %cst_19 : f32 to vector<1x64x128xf32>
      %c0_20 = arith.constant 0 : index
      %c0_21 = arith.constant 0 : index
      %c0_22 = arith.constant 0 : index
      %16 = vector.load %arg7[%c0_20, %c0_21, %c0_22] : memref<1x64x128xf32, #tpu.memory_space<vmem>>, vector<1x64x128xf32>
      tpu.vector_store %arg7[%c0_20, %c0_21, %c0_22], %15 {strides = array<i32>} : memref<1x64x128xf32, #tpu.memory_space<vmem>>, vector<1x64x128xf32>,
    } else {
    }
    %c0 = arith.constant 0 : index
    %c0_1 = arith.constant 0 : index
    %c0_2 = arith.constant 0 : index
    %3 = vector.load %arg2[%c0, %c0_1, %c0_2] : memref<1x64x128xf32, #tpu.memory_space<vmem>>, vector<1x64x128xf32>
    %c0_3 = arith.constant 0 : index
    %c0_4 = arith.constant 0 : index
    %c0_5 = arith.constant 0 : index
    %4 = vector.load %arg6[%c0_3, %c0_4, %c0_5] : memref<1x64x128xf32, #tpu.memory_space<vmem>>, vector<1x64x128xf32>
    %5 = arith.addf %4, %3 : vector<1x64x128xf32>
    %c0_6 = arith.constant 0 : index
    %c0_7 = arith.constant 0 : index
    %c0_8 = arith.constant 0 : index
    %6 = vector.load %arg6[%c0_6, %c0_7, %c0_8] : memref<1x64x128xf32, #tpu.memory_space<vmem>>, vector<1x64x128xf32>
    tpu.vector_store %arg6[%c0_6, %c0_7, %c0_8], %5 {strides = array<i32>} : memref<1x64x128xf32, #tpu.memory_space<vmem>>, vector<1x64x128xf32>,
    %c0_9 = arith.constant 0 : index
    %c0_10 = arith.constant 0 : index
    %c0_11 = arith.constant 0 : index
    %7 = vector.load %arg7[%c0_9, %c0_10, %c0_11] : memref<1x64x128xf32, #tpu.memory_space<vmem>>, vector<1x64x128xf32>
    %8 = arith.maximumf %7, %3 : vector<1x64x128xf32>
    %c0_12 = arith.constant 0 : index
    %c0_13 = arith.constant 0 : index
    %c0_14 = arith.constant 0 : index
    %9 = vector.load %arg7[%c0_12, %c0_13, %c0_14] : memref<1x64x128xf32, #tpu.memory_space<vmem>>, vector<1x64x128xf32>
    tpu.vector_store %arg7[%c0_12, %c0_13, %c0_14], %8 {strides = array<i32>} : memref<1x64x128xf32, #tpu.memory_space<vmem>>, vector<1x64x128xf32>,
    %c1_i32 = arith.constant 1 : i32
    %10 = arith.cmpi eq, %arg1, %c1_i32 : i32
    %11 = arith.extui %10 : i1 to i32
    %c0_i32_15 = arith.constant 0 : i32
    %12 = arith.cmpi ne, %11, %c0_i32_15 : i32
    scf.if %12 {
      %c0_16 = arith.constant 0 : index
      %c0_17 = arith.constant 0 : index
      %13 = vector.load %arg3[%c0_16, %c0_17] : memref<4x64xf32, #tpu.memory_space<vmem>>, vector<4x64xf32>
      %c0_18 = arith.constant 0 : index
      %c0_19 = arith.constant 0 : index
      %14 = vector.load %arg4[%c0_18, %c0_19] : memref<64x4xf32, #tpu.memory_space<vmem>>, vector<64x4xf32>
      %c0_20 = arith.constant 0 : index
      %c0_21 = arith.constant 0 : index
      %c0_22 = arith.constant 0 : index
      %15 = vector.load %arg6[%c0_20, %c0_21, %c0_22] : memref<1x64x128xf32, #tpu.memory_space<vmem>>, vector<1x64x128xf32>
      %16 = vector.shape_cast %15 : vector<1x64x128xf32> to vector<64x128xf32>
      %cst = arith.constant dense<0.000000e+00> : vector<64xf32>
      %17 = vector.multi_reduction <add>, %16, %cst [1] : vector<64x128xf32> to vector<64xf32>
      %18 = vector.shape_cast %17 : vector<64xf32> to vector<64x1xf32>
      %cst_23 = arith.constant 3.906250e-03 : f32
      %19 = vector.broadcast %cst_23 : f32 to vector<64x1xf32>
      %20 = arith.mulf %18, %19 : vector<64x1xf32>
      %c0_24 = arith.constant 0 : index
      %c0_25 = arith.constant 0 : index
      %c0_26 = arith.constant 0 : index
      %21 = vector.load %arg7[%c0_24, %c0_25, %c0_26] : memref<1x64x128xf32, #tpu.memory_space<vmem>>, vector<1x64x128xf32>
      %22 = vector.shape_cast %21 : vector<1x64x128xf32> to vector<64x128xf32>
      %cst_27 = arith.constant dense<0xFF800000> : vector<64xf32>
      %23 = vector.multi_reduction <maximumf>, %22, %cst_27 [1] : vector<64x128xf32> to vector<64xf32>
      %24 = vector.shape_cast %23 : vector<64xf32> to vector<64x1xf32>
      %25 = tpu.concatenate %20, %24 in 1 : vector<64x1xf32>, vector<64x1xf32> -> vector<64x2xf32>
      %cst_28 = arith.constant dense<0.000000e+00> : vector<4x2xf32>
      %26 = tpu.matmul %13, %25, %cst_28 {dimension_numbers = #tpu.dot_dimension_numbers<[1], [0], [0], [1], [0, 0, 1, 1], [], []>} : vector<4x64xf32>, vector<64x2xf32>, vector<4x2xf32> -> vector<4x2xf32>
      %cst_29 = arith.constant 0.000000e+00 : f32
      %27 = vector.broadcast %cst_29 : f32 to vector<4x2xf32>
      %28 = arith.maximumf %26, %27 : vector<4x2xf32>
      %cst_30 = arith.constant dense<0.000000e+00> : vector<64x2xf32>
      %29 = tpu.matmul %14, %28, %cst_30 {dimension_numbers = #tpu.dot_dimension_numbers<[1], [0], [0], [1], [0, 0, 1, 1], [], []>} : vector<64x4xf32>, vector<4x2xf32>, vector<64x2xf32> -> vector<64x2xf32>
      %30 = vector.extract_strided_slice %29 {offsets = [0, 0], sizes = [64, 1], strides = [1, 1]} : vector<64x2xf32> to vector<64x1xf32>
      %31 = vector.extract_strided_slice %29 {offsets = [0, 1], sizes = [64, 1], strides = [1, 1]} : vector<64x2xf32> to vector<64x1xf32>
      %32 = arith.addf %30, %31 : vector<64x1xf32>
      %33 = arith.negf %32 : vector<64x1xf32>
      %34 = math.exp %33 : vector<64x1xf32>
      %cst_31 = arith.constant 1.000000e+00 : f32
      %35 = vector.broadcast %cst_31 : f32 to vector<64x1xf32>
      %36 = arith.addf %35, %34 : vector<64x1xf32>
      %37 = arith.divf %35, %36 : vector<64x1xf32>
      %c0_32 = arith.constant 0 : index
      %c0_33 = arith.constant 0 : index
      %c0_34 = arith.constant 0 : index
      %38 = vector.load %arg5[%c0_32, %c0_33, %c0_34] : memref<1x64x1xf32, #tpu.memory_space<vmem>>, vector<1x64x1xf32>
      %39 = vector.shape_cast %38 : vector<1x64x1xf32> to vector<64x1xf32>
      %40 = vector.shape_cast %37 : vector<64x1xf32> to vector<1x64x1xf32>
      tpu.vector_store %arg5[%c0_32, %c0_33, %c0_34], %40 {strides = array<i32>} : memref<1x64x1xf32, #tpu.memory_space<vmem>>, vector<1x64x1xf32>,
    } else {
    }
    return
  }
  func.func @transform_0(%arg0: i32, %arg1: i32) -> (i32, i32, i32) {
    %c0_i32 = arith.constant 0 : i32
    %c0_i32_0 = arith.constant 0 : i32
    return %arg0, %c0_i32, %arg1 : i32, i32, i32
  }
  func.func @transform_1(%arg0: i32, %arg1: i32) -> (i32, i32) {
    %c0_i32 = arith.constant 0 : i32
    %c0_i32_0 = arith.constant 0 : i32
    %c0_i32_1 = arith.constant 0 : i32
    return %c0_i32, %c0_i32_0 : i32, i32
  }
  func.func @transform_2(%arg0: i32, %arg1: i32) -> (i32, i32) {
    %c0_i32 = arith.constant 0 : i32
    %c0_i32_0 = arith.constant 0 : i32
    %c0_i32_1 = arith.constant 0 : i32
    return %c0_i32, %c0_i32_0 : i32, i32
  }
  func.func @transform_3(%arg0: i32, %arg1: i32) -> (i32, i32, i32) {
    %c0_i32 = arith.constant 0 : i32
    %c0_i32_0 = arith.constant 0 : i32
    %c0_i32_1 = arith.constant 0 : i32
    return %arg0, %c0_i32, %c0_i32_0 : i32, i32, i32
  }
}

</mosaic_0001>

<llo_original>
// kernel: tpu_custom_call.1
$region0: #{tpu_custom_call.1}
  #allocation0 [shape = 'u32[]', space=smem, size = 0x4, offset = 0x4, fixed_abs, tag = 'smem constant byte address 0x4 - core index']
  #allocation1 [shape = 'u32[144,128]{1,0:T(1,128)}', space=vmem, size = 0x12000, scoped, tag = 'internal scratch']
  #allocation2 [shape = 'f32[1,64,128]{2,1,0:T(8,128)}', space=vmem, size = 0x8000, scoped, tag = 'scratch operand']
  #allocation3 [shape = 'f32[1,64,128]{2,1,0:T(8,128)}', space=vmem, size = 0x8000, scoped, tag = 'scratch operand']
  %s0 = inlined_call_operand.hbm [shape: f32[2,64,256], index: 0, kind: input, shape index: {}]
  %s1 = inlined_call_operand.vmem [shape: f32[4,64], index: 1, kind: input, shape index: {}]
  %s2 = inlined_call_operand.vmem [shape: f32[64,4], index: 2, kind: input, shape index: {}]
  %s3 = inlined_call_operand.vmem [shape: f32[2,64,1], index: 3, kind: output, shape index: {}]
  %s4 = sld [smem:[#allocation0]]
  $region57: #{tpu_custom_call.1} parent=0
    _
  %s6 = ssub.s32 1, %s4
  %s7 = scalar_select 0, %s6, %s4
  $region1: #{tpu_custom_call.1} parent=0
    #allocation4 [shape = 'u8[65536]{0}', space=vmem, size = 0x10000, scoped, tag = 'input window, operand 0']
    #allocation5 [shape = 's32[2]{0}', space=sflag, size = 0x8, scoped, tag = 'scoped memory for tpu_custom_call.1']
    %8 = vsyncpa [#allocation5], 0
    %s9 = scalar_lea.sflag [#allocation5], 1
    %10 = vsyncpa %s9, 0
    loop: start=0, step=1, limit=6
    $region2: #{tpu_custom_call.1} parent=1 // loop_pre_header
      _
    $region3: #{tpu_custom_call.1} parent=1 // loop_header
      %s12 = sphi 0, %s16
      %p13 = scmp.ge.s32.totalorder %s12, 6
      %s19 = sphi 0, %s31
      %s20 = sphi 0, %s27
      %s21 = sphi 0, %s19
      %s22 = sphi 0, %s20
      %s23 = sphi 0, %s21
      %s24 = sphi 0, %s22
      %s36 = sphi 0, %s38
      %s39 = sphi 0, %s36
      %s40 = sphi 0, %s39
      %s56 = sphi 0, %s40
      %s60 = sphi 0, %s60
      %s62 = sphi 0, %s60
      %s63 = sphi 0, %s62
      %s77 = sphi 0, %s63
      %s81 = sphi 0, %s81
      %s83 = sphi 0, %s81
      %s84 = sphi 0, %s83
      %s98 = sphi 0, %s84
      %s104 = sphi 0, %s106
      %s107 = sphi 0, %s104
      %s108 = sphi 0, %s107
      %s124 = sphi 0, %s108
    $region4: #{tpu_custom_call.1} parent=1 // loop_header_branch
      %15 = sbr.rel (%p13) target = $region8
    $region5: #{tpu_custom_call.1} parent=1 // loop_body
      %s17 = ssub.s32 %s12, 1
      %s18 = ssub.s32 %s12, 2
      %s25 = sadd.s32 1, %s20
      %p26 = scmp.ge.s32.totalorder %s25, 2
      %s27 = scalar_select %p26, 0, %s25
      %s28 = sadd.s32 1, %s19
      %s29 = scalar_select %p26, %s28, %s19
      %p30 = scmp.ge.s32.totalorder %s29, 2
      %s31 = scalar_select %p30, 0, %s29
      %s32 = ssub.s32 %s19, %s31
      %s33 = ssub.s32 %s20, %s27
      %s34 = sor.u32 %s32, %s33
      %p35 = scmp.eq.s32.totalorder %s34, 0
      %s37 = sadd.s32 %s36, 1
      %s38 = scalar_select %p35, %s36, %s37
      %p41 = pneg %p35
      %p42 = scmp.eq.s32.totalorder %s12, 3
      %p43 = por %p41, %p42
      %p44 = scmp.ne.s32.totalorder %s36, %s39
      %p45 = scmp.eq.s32.totalorder %s12, 0
      %p46 = por %p44, %p45
      %p47 = scmp.ne.s32.totalorder %s36, %s39
      %p48 = scmp.eq.s32.totalorder %s17, 3
      %p49 = por %p47, %p48
      %p50 = scmp.ne.s32.totalorder %s39, %s40
      %p51 = scmp.eq.s32.totalorder %s17, 0
      %p52 = por %p50, %p51
      %p53 = scmp.ne.s32.totalorder %s39, %s40
      %p54 = scmp.eq.s32.totalorder %s18, 3
      %p55 = por %p53, %p54
      %p57 = scmp.ne.s32.totalorder %s40, %s56
      %p58 = scmp.eq.s32.totalorder %s18, 0
      %p59 = por %p57, %p58
      %s61 = sadd.s32 %s60, 1
      %p64 = scmp.eq.s32.totalorder %s12, 3
      %p65 = scmp.ne.s32.totalorder %s60, %s62
      %p66 = scmp.eq.s32.totalorder %s12, 0
      %p67 = por %p65, %p66
      %p68 = scmp.ne.s32.totalorder %s60, %s62
      %p69 = scmp.eq.s32.totalorder %s17, 3
      %p70 = por %p68, %p69
      %p71 = scmp.ne.s32.totalorder %s62, %s63
      %p72 = scmp.eq.s32.totalorder %s17, 0
      %p73 = por %p71, %p72
      %p74 = scmp.ne.s32.totalorder %s62, %s63
      %p75 = scmp.eq.s32.totalorder %s18, 3
      %p76 = por %p74, %p75
      %p78 = scmp.ne.s32.totalorder %s63, %s77
      %p79 = scmp.eq.s32.totalorder %s18, 0
      %p80 = por %p78, %p79
      %s82 = sadd.s32 %s81, 1
      %p85 = scmp.eq.s32.totalorder %s12, 3
      %p86 = scmp.ne.s32.totalorder %s81, %s83
      %p87 = scmp.eq.s32.totalorder %s12, 0
      %p88 = por %p86, %p87
      %p89 = scmp.ne.s32.totalorder %s81, %s83
      %p90 = scmp.eq.s32.totalorder %s17, 3
      %p91 = por %p89, %p90
      %p92 = scmp.ne.s32.totalorder %s83, %s84
      %p93 = scmp.eq.s32.totalorder %s17, 0
      %p94 = por %p92, %p93
      %p95 = scmp.ne.s32.totalorder %s83, %s84
      %p96 = scmp.eq.s32.totalorder %s18, 3
      %p97 = por %p95, %p96
      %p99 = scmp.ne.s32.totalorder %s84, %s98
      %p100 = scmp.eq.s32.totalorder %s18, 0
      %p101 = por %p99, %p100
      %s102 = ssub.s32 %s19, %s31
      %p103 = scmp.eq.s32.totalorder %s102, 0
      %s105 = sadd.s32 %s104, 1
      %s106 = scalar_select %p103, %s104, %s105
      %p109 = pneg %p103
      %p110 = scmp.eq.s32.totalorder %s12, 3
      %p111 = por %p109, %p110
      %p112 = scmp.ne.s32.totalorder %s104, %s107
      %p113 = scmp.eq.s32.totalorder %s12, 0
      %p114 = por %p112, %p113
      %p115 = scmp.ne.s32.totalorder %s104, %s107
      %p116 = scmp.eq.s32.totalorder %s17, 3
      %p117 = por %p115, %p116
      %p118 = scmp.ne.s32.totalorder %s107, %s108
      %p119 = scmp.eq.s32.totalorder %s17, 0
      %p120 = por %p118, %p119
      %p121 = scmp.ne.s32.totalorder %s107, %s108
      %p122 = scmp.eq.s32.totalorder %s18, 3
      %p123 = por %p121, %p122
      %p125 = scmp.ne.s32.totalorder %s108, %s124
      %p126 = scmp.eq.s32.totalorder %s18, 0
      %p127 = por %p125, %p126
      %p128 = scmp.le.s32.totalorder 1, %s12
      %p129 = scmp.lt.s32.totalorder %s12, 5
      %p130 = pnand %p128, %p129
      %p131 = pneg %p130
      // Predicated region
      $region9: #{tpu_custom_call.1} parent=5 // pred_check
        _
      $region10: #{tpu_custom_call.1} parent=5 // pred_check_branch
        %133 = sbr.rel (%p130) target = $region12
      $region11: #{tpu_custom_call.1} parent=5 // pred_region
        %s134 = ssub.s32 %s12, 1
        // Predicated region
        $region13: #{tpu_custom_call.1} parent=11 // pred_check
          %p135 = pneg %p73
        $region14: #{tpu_custom_call.1} parent=11 // pred_check_branch
          %137 = sbr.rel (%p135) target = $region16
        $region15: #{tpu_custom_call.1} parent=11 // pred_region
          _
        $region16: #{tpu_custom_call.1} parent=11 // pred_fallthru
          _
        // Predicated region
        $region17: #{tpu_custom_call.1} parent=11 // pred_check
          %p138 = pneg %p94
        $region18: #{tpu_custom_call.1} parent=11 // pred_check_branch
          %140 = sbr.rel (%p138) target = $region20
        $region19: #{tpu_custom_call.1} parent=11 // pred_region
          _
        $region20: #{tpu_custom_call.1} parent=11 // pred_fallthru
          _
      $region12: #{tpu_custom_call.1} parent=5 // pred_fallthru
        _
      %p141 = scmp.lt.s32.totalorder %s12, 4
      // Predicated region
      $region21: #{tpu_custom_call.1} parent=5 // pred_check
        %p142 = pneg %p141
      $region22: #{tpu_custom_call.1} parent=5 // pred_check_branch
        %144 = sbr.rel (%p142) target = $region24
      $region23: #{tpu_custom_call.1} parent=5 // pred_region
        // Predicated region
        $region25: #{tpu_custom_call.1} parent=23 // pred_check
          %p145 = pneg %p46
        $region26: #{tpu_custom_call.1} parent=23 // pred_check_branch
          %147 = sbr.rel (%p145) target = $region28
        $region27: #{tpu_custom_call.1} parent=23 // pred_region
          %s148 = sand.u32 %s36, 1
          %s149 = scalar_lea.sflag [#allocation5], %s148
          %s150 = sand.u32 %s36, 1
          %s151 = smul.addr %s150, 64
          %s152 = scalar_lea.vmem [#allocation4], %s151
          %s154 = ssub.s32 1024, 1024
          %155 = vsyncadd %s149, %s154
          %s156 = smul.addr %s19, 16
          %s157 = sadd.s32 %s20, %s156
          %s158 = smul.addr %s157, 128
          %s159 = scalar_lea.hbm %s0, %s158
          %s160 = sshll.u32 %s152, 4
          %s161 = int_to_ptr.vmem [resolvable:$true] %s160
          %166 = dma.hbm_to_vmem [thread:$0]  %s159, 1024, %s161, %s149, 256, 128, 8
        $region28: #{tpu_custom_call.1} parent=23 // pred_fallthru
          _
      $region24: #{tpu_custom_call.1} parent=5 // pred_fallthru
        _
      %p167 = scmp.le.s32.totalorder 1, %s12
      %p168 = scmp.lt.s32.totalorder %s12, 5
      %p169 = pnand %p167, %p168
      %p170 = pneg %p169
      // Predicated region
      $region29: #{tpu_custom_call.1} parent=5 // pred_check
        _
      $region30: #{tpu_custom_call.1} parent=5 // pred_check_branch
        %172 = sbr.rel (%p169) target = $region32
      $region31: #{tpu_custom_call.1} parent=5 // pred_region
        %s173 = ssub.s32 %s12, 1
        %s174 = sand.u32 %s39, 1
        %s175 = scalar_lea.sflag [#allocation5], %s174
        %s176 = sand.u32 %s39, 1
        %s177 = smul.addr %s176, 64
        %s178 = scalar_lea.vmem [#allocation4], %s177
        // Predicated region
        $region33: #{tpu_custom_call.1} parent=31 // pred_check
          %p179 = pneg %p52
        $region34: #{tpu_custom_call.1} parent=31 // pred_check_branch
          %181 = sbr.rel (%p179) target = $region36
        $region35: #{tpu_custom_call.1} parent=31 // pred_region
          %182 = dma.done %s175, 1024
        $region36: #{tpu_custom_call.1} parent=31 // pred_fallthru
          _
        %s183 = sand.u32 %s39, 1
        %s184 = scalar_lea.sflag [#allocation5], %s183
        %s185 = sand.u32 %s39, 1
        %s186 = smul.addr %s185, 64
        %s187 = scalar_lea.vmem [#allocation4], %s186
        %p188 = pneg %p52
        %p189 = pneg %p49
        %p190 = pneg %p73
        %p191 = pneg %p70
        %p192 = pneg %p94
        %p193 = pneg %p91
        %p194 = pneg %p120
        %p195 = pneg %p117
        %p196 = scmp.lt.s32.totalorder %s21, 1
        %s197 = scalar_select %p196, %s21, 1
        %s198 = smul.addr %s197, 8
        %s199 = smul.addr %s198, 8
        %s200 = scalar_lea.vmem %s3, %s199
        %p201 = scmp.lt.s32.totalorder %s21, 1
        %s202 = scalar_select %p201, %s21, 1
        %s203 = smul.addr %s202, 8
        %s204 = smul.addr %s203, 8
        %s205 = scalar_lea.vmem %s3, %s204
        %p206 = scmp.eq.s32.totalorder %s22, 0
        // Predicated region
        $region37: #{tpu_custom_call.1} parent=31 // pred_check
          %p207 = pneg %p206
        $region38: #{tpu_custom_call.1} parent=31 // pred_check_branch
          %209 = sbr.rel (%p207) target = $region40
        $region39: #{tpu_custom_call.1} parent=31 // pred_region
          %210 = vst [vmem:[#allocation2] sm:$0xff] 0.0
          %211 = vst [vmem:[#allocation2 + $0x8] sm:$0xff] 0.0
          %212 = vst [vmem:[#allocation2 + $0x10] sm:$0xff] 0.0
          %213 = vst [vmem:[#allocation2 + $0x18] sm:$0xff] 0.0
          %214 = vst [vmem:[#allocation2 + $0x20] sm:$0xff] 0.0
          %215 = vst [vmem:[#allocation2 + $0x28] sm:$0xff] 0.0
          %216 = vst [vmem:[#allocation2 + $0x30] sm:$0xff] 0.0
          %217 = vst [vmem:[#allocation2 + $0x38] sm:$0xff] 0.0
          %218 = vst [vmem:[#allocation3] sm:$0xff] -inf
          %219 = vst [vmem:[#allocation3 + $0x8] sm:$0xff] -inf
          %220 = vst [vmem:[#allocation3 + $0x10] sm:$0xff] -inf
          %221 = vst [vmem:[#allocation3 + $0x18] sm:$0xff] -inf
          %222 = vst [vmem:[#allocation3 + $0x20] sm:$0xff] -inf
          %223 = vst [vmem:[#allocation3 + $0x28] sm:$0xff] -inf
          %224 = vst [vmem:[#allocation3 + $0x30] sm:$0xff] -inf
          %225 = vst [vmem:[#allocation3 + $0x38] sm:$0xff] -inf
        $region40: #{tpu_custom_call.1} parent=31 // pred_fallthru
          _
        %v226 = vld [vmem:[%s178] sm:$0xff]
        %v227 = vld [vmem:[%s178 + $0x8] sm:$0xff]
        %v228 = vld [vmem:[%s178 + $0x10] sm:$0xff]
        %v229 = vld [vmem:[%s178 + $0x18] sm:$0xff]
        %v230 = vld [vmem:[%s178 + $0x20] sm:$0xff]
        %v231 = vld [vmem:[%s178 + $0x28] sm:$0xff]
        %v232 = vld [vmem:[%s178 + $0x30] sm:$0xff]
        %v233 = vld [vmem:[%s178 + $0x38] sm:$0xff]
        %v234 = vld [vmem:[#allocation2] sm:$0xff]
        %v235 = vld [vmem:[#allocation2 + $0x8] sm:$0xff]
        %v236 = vld [vmem:[#allocation2 + $0x10] sm:$0xff]
        %v237 = vld [vmem:[#allocation2 + $0x18] sm:$0xff]
        %v238 = vld [vmem:[#allocation2 + $0x20] sm:$0xff]
        %v239 = vld [vmem:[#allocation2 + $0x28] sm:$0xff]
        %v240 = vld [vmem:[#allocation2 + $0x30] sm:$0xff]
        %v241 = vld [vmem:[#allocation2 + $0x38] sm:$0xff]
        %v242 = vadd.f32 %v234, %v226
        %v243 = vadd.f32 %v235, %v227
        %v244 = vadd.f32 %v236, %v228
        %v245 = vadd.f32 %v237, %v229
        %v246 = vadd.f32 %v238, %v230
        %v247 = vadd.f32 %v239, %v231
        %v248 = vadd.f32 %v240, %v232
        %v249 = vadd.f32 %v241, %v233
        %250 = vst [vmem:[#allocation2] sm:$0xff] %v242
        %251 = vst [vmem:[#allocation2 + $0x8] sm:$0xff] %v243
        %252 = vst [vmem:[#allocation2 + $0x10] sm:$0xff] %v244
        %253 = vst [vmem:[#allocation2 + $0x18] sm:$0xff] %v245
        %254 = vst [vmem:[#allocation2 + $0x20] sm:$0xff] %v246
        %255 = vst [vmem:[#allocation2 + $0x28] sm:$0xff] %v247
        %256 = vst [vmem:[#allocation2 + $0x30] sm:$0xff] %v248
        %257 = vst [vmem:[#allocation2 + $0x38] sm:$0xff] %v249
        %v258 = vld [vmem:[#allocation3] sm:$0xff]
        %v259 = vld [vmem:[#allocation3 + $0x8] sm:$0xff]
        %v260 = vld [vmem:[#allocation3 + $0x10] sm:$0xff]
        %v261 = vld [vmem:[#allocation3 + $0x18] sm:$0xff]
        %v262 = vld [vmem:[#allocation3 + $0x20] sm:$0xff]
        %v263 = vld [vmem:[#allocation3 + $0x28] sm:$0xff]
        %v264 = vld [vmem:[#allocation3 + $0x30] sm:$0xff]
        %v265 = vld [vmem:[#allocation3 + $0x38] sm:$0xff]
        %v266 = vmax.f32 %v258, %v226
        %v267 = vmax.f32 %v259, %v227
        %v268 = vmax.f32 %v260, %v228
        %v269 = vmax.f32 %v261, %v229
        %v270 = vmax.f32 %v262, %v230
        %v271 = vmax.f32 %v263, %v231
        %v272 = vmax.f32 %v264, %v232
        %v273 = vmax.f32 %v265, %v233
        %274 = vst [vmem:[#allocation3] sm:$0xff] %v266
        %275 = vst [vmem:[#allocation3 + $0x8] sm:$0xff] %v267
        %276 = vst [vmem:[#allocation3 + $0x10] sm:$0xff] %v268
        %277 = vst [vmem:[#allocation3 + $0x18] sm:$0xff] %v269
        %278 = vst [vmem:[#allocation3 + $0x20] sm:$0xff] %v270
        %279 = vst [vmem:[#allocation3 + $0x28] sm:$0xff] %v271
        %280 = vst [vmem:[#allocation3 + $0x30] sm:$0xff] %v272
        %281 = vst [vmem:[#allocation3 + $0x38] sm:$0xff] %v273
        %p282 = scmp.eq.s32.totalorder %s22, 1
        // Predicated region
        $region41: #{tpu_custom_call.1} parent=31 // pred_check
          %p283 = pneg %p282
        $region42: #{tpu_custom_call.1} parent=31 // pred_check_branch
          %285 = sbr.rel (%p283) target = $region44
        $region43: #{tpu_custom_call.1} parent=31 // pred_region
          %v286 = vld [vmem:[%s1] sm:$0xf]
          %v287 = vld [vmem:[%s2] sm:$0xff]
          %v288 = vld [vmem:[%s2 + $0x8] sm:$0xff]
          %v289 = vld [vmem:[%s2 + $0x10] sm:$0xff]
          %v290 = vld [vmem:[%s2 + $0x18] sm:$0xff]
          %v291 = vld [vmem:[%s2 + $0x20] sm:$0xff]
          %v292 = vld [vmem:[%s2 + $0x28] sm:$0xff]
          %v293 = vld [vmem:[%s2 + $0x30] sm:$0xff]
          %v294 = vld [vmem:[%s2 + $0x38] sm:$0xff]
          %v295 = vld [vmem:[#allocation2] sm:$0xff]
          %v296 = vld [vmem:[#allocation2 + $0x8] sm:$0xff]
          %v297 = vld [vmem:[#allocation2 + $0x10] sm:$0xff]
          %v298 = vld [vmem:[#allocation2 + $0x18] sm:$0xff]
          %v299 = vld [vmem:[#allocation2 + $0x20] sm:$0xff]
          %v300 = vld [vmem:[#allocation2 + $0x28] sm:$0xff]
          %v301 = vld [vmem:[#allocation2 + $0x30] sm:$0xff]
          %v302 = vld [vmem:[#allocation2 + $0x38] sm:$0xff]
          %303 = vadd.xlane.f32.xlu0 %v295
          %v304 = vpop.xlane.xlu0 %303
          %305 = vadd.xlane.f32.xlu0 %v296
          %v306 = vpop.xlane.xlu0 %305
          %307 = vadd.xlane.f32.xlu0 %v297
          %v308 = vpop.xlane.xlu0 %307
          %309 = vadd.xlane.f32.xlu0 %v298
          %v310 = vpop.xlane.xlu0 %309
          %311 = vadd.xlane.f32.xlu0 %v299
          %v312 = vpop.xlane.xlu0 %311
          %313 = vadd.xlane.f32.xlu0 %v300
          %v314 = vpop.xlane.xlu0 %313
          %315 = vadd.xlane.f32.xlu0 %v301
          %v316 = vpop.xlane.xlu0 %315
          %317 = vadd.xlane.f32.xlu0 %v302
          %v318 = vpop.xlane.xlu0 %317
          %v319 = vmul.f32 %v304, 0.00390625
          %v320 = vmul.f32 %v306, 0.00390625
          %v321 = vmul.f32 %v308, 0.00390625
          %v322 = vmul.f32 %v310, 0.00390625
          %v323 = vmul.f32 %v312, 0.00390625
          %v324 = vmul.f32 %v314, 0.00390625
          %v325 = vmul.f32 %v316, 0.00390625
          %v326 = vmul.f32 %v318, 0.00390625
          %v327 = vld [vmem:[#allocation3] sm:$0xff]
          %v328 = vld [vmem:[#allocation3 + $0x8] sm:$0xff]
          %v329 = vld [vmem:[#allocation3 + $0x10] sm:$0xff]
          %v330 = vld [vmem:[#allocation3 + $0x18] sm:$0xff]
          %v331 = vld [vmem:[#allocation3 + $0x20] sm:$0xff]
          %v332 = vld [vmem:[#allocation3 + $0x28] sm:$0xff]
          %v333 = vld [vmem:[#allocation3 + $0x30] sm:$0xff]
          %v334 = vld [vmem:[#allocation3 + $0x38] sm:$0xff]
          %335 = vmax.xlane.f32.xlu0 %v327
          %v336 = vpop.xlane.xlu0 %335
          %337 = vmax.xlane.f32.xlu0 %v328
          %v338 = vpop.xlane.xlu0 %337
          %339 = vmax.xlane.f32.xlu0 %v329
          %v340 = vpop.xlane.xlu0 %339
          %341 = vmax.xlane.f32.xlu0 %v330
          %v342 = vpop.xlane.xlu0 %341
          %343 = vmax.xlane.f32.xlu0 %v331
          %v344 = vpop.xlane.xlu0 %343
          %345 = vmax.xlane.f32.xlu0 %v332
          %v346 = vpop.xlane.xlu0 %345
          %347 = vmax.xlane.f32.xlu0 %v333
          %v348 = vpop.xlane.xlu0 %347
          %349 = vmax.xlane.f32.xlu0 %v334
          %v350 = vpop.xlane.xlu0 %349
          %vm351 = vcmask 7168
          %v352 = vsel %vm351, %v319, %v336
          %v353 = vsel %vm351, %v320, %v338
          %v354 = vsel %vm351, %v321, %v340
          %v355 = vsel %vm351, %v322, %v342
          %v356 = vsel %vm351, %v323, %v344
          %v357 = vsel %vm351, %v324, %v346
          %v358 = vsel %vm351, %v325, %v348
          %v359 = vsel %vm351, %v326, %v350
          %vm360 = vcmask 523264
          %v362 = vsel %vm360, %v286, 0
          %364 = vmatprep.subr.mxu0 0.0
          %365 = vmatpush1.msra.mxu0 0.0
          %366 = vmatprep.subr.mxu0 0.0
          %367 = vmatpush1.msra.mxu0 0.0
          %368 = vmatprep.subr.mxu0 0.0
          %369 = vmatpush1.msra.mxu0 0.0
          %370 = vmatprep.subr.mxu0 0.0
          %371 = vmatpush1.msra.mxu0 0.0
          %372 = vmatprep.subr.mxu0 0.0
          %373 = vmatpush1.msra.mxu0 0.0
          %374 = vmatprep.subr.mxu0 0.0
          %375 = vmatpush1.msra.mxu0 0.0
          %376 = vmatprep.subr.mxu0 0.0
          %377 = vmatpush1.msra.mxu0 0.0
          %378 = vmatprep.subr.mxu0 0.0
          %379 = vmatpush1.msra.mxu0 0.0
          %380 = vmatprep.subr.mxu0 0.0
          %381 = vmatpush1.msra.mxu0 %v359
          %382 = vmatprep.subr.mxu0 0.0
          %383 = vmatpush1.msra.mxu0 %v358
          %384 = vmatprep.subr.mxu0 0.0
          %385 = vmatpush1.msra.mxu0 %v357
          %386 = vmatprep.subr.mxu0 0.0
          %387 = vmatpush1.msra.mxu0 %v356
          %388 = vmatprep.subr.mxu0 0.0
          %389 = vmatpush1.msra.mxu0 %v355
          %390 = vmatprep.subr.mxu0 0.0
          %391 = vmatpush1.msra.mxu0 %v354
          %392 = vmatprep.subr.mxu0 0.0
          %393 = vmatpush1.msra.mxu0 %v353
          %394 = vmatprep.subr.mxu0 0.0
          %395 = vmatpush1.msra.mxu0 %v352
          %396 = vmatprep.subr.mxu0 0.0
          %397 = vmatpush2.msra.mxu0 0.0
          %398 = vmatprep.subr.mxu0 0.0
          %399 = vmatpush2.msra.mxu0 0.0
          %400 = vmatprep.subr.mxu0 0.0
          %401 = vmatpush2.msra.mxu0 0.0
          %402 = vmatprep.subr.mxu0 0.0
          %403 = vmatpush2.msra.mxu0 0.0
          %404 = vmatprep.subr.mxu0 0.0
          %405 = vmatpush2.msra.mxu0 0.0
          %406 = vmatprep.subr.mxu0 0.0
          %407 = vmatpush2.msra.mxu0 0.0
          %408 = vmatprep.subr.mxu0 0.0
          %409 = vmatpush2.msra.mxu0 0.0
          %410 = vmatprep.subr.mxu0 0.0
          %411 = vmatpush2.msra.mxu0 0.0
          %412 = vmatprep.subr.mxu0 0.0
          %413 = vmatpush2.msra.mxu0 0.0
          %414 = vmatprep.subr.mxu0 0.0
          %415 = vmatpush2.msra.mxu0 0.0
          %416 = vmatprep.subr.mxu0 0.0
          %417 = vmatpush2.msra.mxu0 0.0
          %418 = vmatprep.subr.mxu0 0.0
          %419 = vmatpush2.msra.mxu0 0.0
          %420 = vmatprep.subr.mxu0 0.0
          %421 = vmatpush2.msra.mxu0 0.0
          %422 = vmatprep.subr.mxu0 0.0
          %423 = vmatpush2.msra.mxu0 0.0
          %424 = vmatprep.subr.mxu0 0.0
          %425 = vmatpush2.msra.mxu0 0.0
          %426 = vmatprep.subr.mxu0 0.0
          %427 = vmatpush2.msra.mxu0 0.0
          %428 = vmatprep.mubr.f32.mxu0 0.0
          %429 = vmatmul.mubr.f32.gmra.mxu0 %v362
          %v430 = vpop.f32.mrf.mxu0
          %v431 = vadd.f32 0.0, %v430
          %v432 = vpop.f32.mrf.mxu0
          %433 = vdwg.mxu0
          %v434 = vmax.f32 %v431, 0.0
          %vm435 = vcmask 31744
          %v437 = vsel %vm435, %v287, 0
          %v440 = vsel %vm435, %v288, 0
          %v443 = vsel %vm435, %v289, 0
          %v446 = vsel %vm435, %v290, 0
          %v449 = vsel %vm435, %v291, 0
          %v452 = vsel %vm435, %v292, 0
          %v455 = vsel %vm435, %v293, 0
          %v458 = vsel %vm435, %v294, 0
          %vm460 = vcmask 1043456
          %v462 = vsel %vm460, %v434, 0
          %464 = vmatprep.subr.mxu0 0.0
          %465 = vmatpush1.msra.mxu0 0.0
          %466 = vmatprep.subr.mxu0 0.0
          %467 = vmatpush1.msra.mxu0 0.0
          %468 = vmatprep.subr.mxu0 0.0
          %469 = vmatpush1.msra.mxu0 0.0
          %470 = vmatprep.subr.mxu0 0.0
          %471 = vmatpush1.msra.mxu0 0.0
          %472 = vmatprep.subr.mxu0 0.0
          %473 = vmatpush1.msra.mxu0 0.0
          %474 = vmatprep.subr.mxu0 0.0
          %475 = vmatpush1.msra.mxu0 0.0
          %476 = vmatprep.subr.mxu0 0.0
          %477 = vmatpush1.msra.mxu0 0.0
          %478 = vmatprep.subr.mxu0 0.0
          %479 = vmatpush1.msra.mxu0 0.0
          %480 = vmatprep.subr.mxu0 0.0
          %481 = vmatpush1.msra.mxu0 0.0
          %482 = vmatprep.subr.mxu0 0.0
          %483 = vmatpush1.msra.mxu0 0.0
          %484 = vmatprep.subr.mxu0 0.0
          %485 = vmatpush1.msra.mxu0 0.0
          %486 = vmatprep.subr.mxu0 0.0
          %487 = vmatpush1.msra.mxu0 0.0
          %488 = vmatprep.subr.mxu0 0.0
          %489 = vmatpush1.msra.mxu0 0.0
          %490 = vmatprep.subr.mxu0 0.0
          %491 = vmatpush1.msra.mxu0 0.0
          %492 = vmatprep.subr.mxu0 0.0
          %493 = vmatpush1.msra.mxu0 0.0
          %494 = vmatprep.subr.mxu0 0.0
          %495 = vmatpush1.msra.mxu0 %v462
          %496 = vmatprep.subr.mxu0 0.0
          %497 = vmatpush2.msra.mxu0 0.0
          %498 = vmatprep.subr.mxu0 0.0
          %499 = vmatpush2.msra.mxu0 0.0
          %500 = vmatprep.subr.mxu0 0.0
          %501 = vmatpush2.msra.mxu0 0.0
          %502 = vmatprep.subr.mxu0 0.0
          %503 = vmatpush2.msra.mxu0 0.0
          %504 = vmatprep.subr.mxu0 0.0
          %505 = vmatpush2.msra.mxu0 0.0
          %506 = vmatprep.subr.mxu0 0.0
          %507 = vmatpush2.msra.mxu0 0.0
          %508 = vmatprep.subr.mxu0 0.0
          %509 = vmatpush2.msra.mxu0 0.0
          %510 = vmatprep.subr.mxu0 0.0
          %511 = vmatpush2.msra.mxu0 0.0
          %512 = vmatprep.subr.mxu0 0.0
          %513 = vmatpush2.msra.mxu0 0.0
          %514 = vmatprep.subr.mxu0 0.0
          %515 = vmatpush2.msra.mxu0 0.0
          %516 = vmatprep.subr.mxu0 0.0
          %517 = vmatpush2.msra.mxu0 0.0
          %518 = vmatprep.subr.mxu0 0.0
          %519 = vmatpush2.msra.mxu0 0.0
          %520 = vmatprep.subr.mxu0 0.0
          %521 = vmatpush2.msra.mxu0 0.0
          %522 = vmatprep.subr.mxu0 0.0
          %523 = vmatpush2.msra.mxu0 0.0
          %524 = vmatprep.subr.mxu0 0.0
          %525 = vmatpush2.msra.mxu0 0.0
          %526 = vmatprep.subr.mxu0 0.0
          %527 = vmatpush2.msra.mxu0 0.0
          %528 = vmatprep.mubr.f32.mxu0 0.0
          %529 = vmatmul.mubr.f32.gmra.mxu0 %v437
          %v530 = vpop.f32.mrf.mxu0
          %v531 = vadd.f32 0.0, %v530
          %v532 = vpop.f32.mrf.mxu0
          %533 = vmatprep.mubr.f32.mxu0 0.0
          %534 = vmatmul.mubr.f32.gmra.mxu0 %v440
          %v535 = vpop.f32.mrf.mxu0
          %v536 = vadd.f32 0.0, %v535
          %v537 = vpop.f32.mrf.mxu0
          %538 = vmatprep.mubr.f32.mxu0 0.0
          %539 = vmatmul.mubr.f32.gmra.mxu0 %v443
          %v540 = vpop.f32.mrf.mxu0
          %v541 = vadd.f32 0.0, %v540
          %v542 = vpop.f32.mrf.mxu0
          %543 = vmatprep.mubr.f32.mxu0 0.0
          %544 = vmatmul.mubr.f32.gmra.mxu0 %v446
          %v545 = vpop.f32.mrf.mxu0
          %v546 = vadd.f32 0.0, %v545
          %v547 = vpop.f32.mrf.mxu0
          %548 = vmatprep.mubr.f32.mxu0 0.0
          %549 = vmatmul.mubr.f32.gmra.mxu0 %v449
          %v550 = vpop.f32.mrf.mxu0
          %v551 = vadd.f32 0.0, %v550
          %v552 = vpop.f32.mrf.mxu0
          %553 = vmatprep.mubr.f32.mxu0 0.0
          %554 = vmatmul.mubr.f32.gmra.mxu0 %v452
          %v555 = vpop.f32.mrf.mxu0
          %v556 = vadd.f32 0.0, %v555
          %v557 = vpop.f32.mrf.mxu0
          %558 = vmatprep.mubr.f32.mxu0 0.0
          %559 = vmatmul.mubr.f32.gmra.mxu0 %v455
          %v560 = vpop.f32.mrf.mxu0
          %v561 = vadd.f32 0.0, %v560
          %v562 = vpop.f32.mrf.mxu0
          %563 = vmatprep.mubr.f32.mxu0 0.0
          %564 = vmatmul.mubr.f32.gmra.mxu0 %v458
          %v565 = vpop.f32.mrf.mxu0
          %v566 = vadd.f32 0.0, %v565
          %v567 = vpop.f32.mrf.mxu0
          %568 = vdwg.mxu0
          %577 = vrot.lane.b32.xlu0 %v531, 127
          %v578 = vpop.permute.xlu0 %577
          %579 = vrot.lane.b32.xlu0 %v536, 127
          %v580 = vpop.permute.xlu0 %579
          %581 = vrot.lane.b32.xlu0 %v541, 127
          %v582 = vpop.permute.xlu0 %581
          %583 = vrot.lane.b32.xlu0 %v546, 127
          %v584 = vpop.permute.xlu0 %583
          %585 = vrot.lane.b32.xlu0 %v551, 127
          %v586 = vpop.permute.xlu0 %585
          %587 = vrot.lane.b32.xlu0 %v556, 127
          %v588 = vpop.permute.xlu0 %587
          %589 = vrot.lane.b32.xlu0 %v561, 127
          %v590 = vpop.permute.xlu0 %589
          %591 = vrot.lane.b32.xlu0 %v566, 127
          %v592 = vpop.permute.xlu0 %591
          %v601 = vadd.f32 %v531, %v578
          %v602 = vadd.f32 %v536, %v580
          %v603 = vadd.f32 %v541, %v582
          %v604 = vadd.f32 %v546, %v584
          %v605 = vadd.f32 %v551, %v586
          %v606 = vadd.f32 %v556, %v588
          %v607 = vadd.f32 %v561, %v590
          %v608 = vadd.f32 %v566, %v592
          %v609 = vxor.u32 %v601, 2147483648
          %v610 = vxor.u32 %v602, 2147483648
          %v611 = vxor.u32 %v603, 2147483648
          %v612 = vxor.u32 %v604, 2147483648
          %v613 = vxor.u32 %v605, 2147483648
          %v614 = vxor.u32 %v606, 2147483648
          %v615 = vxor.u32 %v607, 2147483648
          %v616 = vxor.u32 %v608, 2147483648
          %v617 = vmul.f32 %v609, 1.442695
          %v618 = vpow.pop %v617
          %v619 = vmul.f32 %v610, 1.442695
          %v620 = vpow.pop %v619
          %v621 = vmul.f32 %v611, 1.442695
          %v622 = vpow.pop %v621
          %v623 = vmul.f32 %v612, 1.442695
          %v624 = vpow.pop %v623
          %v625 = vmul.f32 %v613, 1.442695
          %v626 = vpow.pop %v625
          %v627 = vmul.f32 %v614, 1.442695
          %v628 = vpow.pop %v627
          %v629 = vmul.f32 %v615, 1.442695
          %v630 = vpow.pop %v629
          %v631 = vmul.f32 %v616, 1.442695
          %v632 = vpow.pop %v631
          %v633 = vadd.f32 %v618, 1.0
          %v634 = vadd.f32 %v620, 1.0
          %v635 = vadd.f32 %v622, 1.0
          %v636 = vadd.f32 %v624, 1.0
          %v637 = vadd.f32 %v626, 1.0
          %v638 = vadd.f32 %v628, 1.0
          %v639 = vadd.f32 %v630, 1.0
          %v640 = vadd.f32 %v632, 1.0
          %v641 = vrcp.pop %v633
          %v642 = vmul.f32 1.0, %v641
          %v643 = vrcp.pop %v634
          %v644 = vmul.f32 1.0, %v643
          %v645 = vrcp.pop %v635
          %v646 = vmul.f32 1.0, %v645
          %v647 = vrcp.pop %v636
          %v648 = vmul.f32 1.0, %v647
          %v649 = vrcp.pop %v637
          %v650 = vmul.f32 1.0, %v649
          %v651 = vrcp.pop %v638
          %v652 = vmul.f32 1.0, %v651
          %v653 = vrcp.pop %v639
          %v654 = vmul.f32 1.0, %v653
          %v655 = vrcp.pop %v640
          %v656 = vmul.f32 1.0, %v655
          %657 = vst.msk [vmem:[%s205] sm:$0xff] %vm351, %v642
          %658 = vst.msk [vmem:[%s205 + $0x8] sm:$0xff] %vm351, %v644
          %659 = vst.msk [vmem:[%s205 + $0x10] sm:$0xff] %vm351, %v646
          %660 = vst.msk [vmem:[%s205 + $0x18] sm:$0xff] %vm351, %v648
          %661 = vst.msk [vmem:[%s205 + $0x20] sm:$0xff] %vm351, %v650
          %662 = vst.msk [vmem:[%s205 + $0x28] sm:$0xff] %vm351, %v652
          %663 = vst.msk [vmem:[%s205 + $0x30] sm:$0xff] %vm351, %v654
          %664 = vst.msk [vmem:[%s205 + $0x38] sm:$0xff] %vm351, %v656
        $region44: #{tpu_custom_call.1} parent=31 // pred_fallthru
          _
        %p665 = scmp.lt.s32.totalorder %s21, 1
        %s666 = scalar_select %p665, %s21, 1
        %s667 = smul.addr %s666, 8
        %s668 = smul.addr %s667, 8
        %s669 = scalar_lea.vmem %s3, %s668
        // Predicated region
        $region45: #{tpu_custom_call.1} parent=31 // pred_check
          %p670 = pneg %p117
        $region46: #{tpu_custom_call.1} parent=31 // pred_check_branch
          %672 = sbr.rel (%p670) target = $region48
        $region47: #{tpu_custom_call.1} parent=31 // pred_region
          _
        $region48: #{tpu_custom_call.1} parent=31 // pred_fallthru
          _
      $region32: #{tpu_custom_call.1} parent=5 // pred_fallthru
        _
      %p673 = scmp.le.s32.totalorder 2, %s12
      // Predicated region
      $region49: #{tpu_custom_call.1} parent=5 // pred_check
        %p674 = pneg %p673
      $region50: #{tpu_custom_call.1} parent=5 // pred_check_branch
        %676 = sbr.rel (%p674) target = $region52
      $region51: #{tpu_custom_call.1} parent=5 // pred_region
        %s677 = ssub.s32 %s12, 2
        // Predicated region
        $region53: #{tpu_custom_call.1} parent=51 // pred_check
          %p678 = pneg %p123
        $region54: #{tpu_custom_call.1} parent=51 // pred_check_branch
          %680 = sbr.rel (%p678) target = $region56
        $region55: #{tpu_custom_call.1} parent=51 // pred_region
          %p681 = scmp.lt.s32.totalorder %s23, 1
          %s682 = scalar_select %p681, %s23, 1
          %s683 = smul.addr %s682, 8
          %s684 = smul.addr %s683, 8
          %s685 = scalar_lea.vmem %s3, %s684
        $region56: #{tpu_custom_call.1} parent=51 // pred_fallthru
          _
      $region52: #{tpu_custom_call.1} parent=5 // pred_fallthru
        _
    $region6: #{tpu_custom_call.1} parent=1 // loop_footer
      %s16 = sadd.s32 1, %s12
    $region7: #{tpu_custom_call.1} parent=1 // loop_footer_branch
      %11 = sbr.rel target = $region3
    $region8: #{tpu_custom_call.1} parent=1 // loop_exit
      _
    %686 = vsyncpa [#allocation5], 1
    %s687 = scalar_lea.sflag [#allocation5], 1
    %688 = vsyncpa %s687, 1

</llo_original>
